<compile_context>
chip_gen: v7x
topology: tpu7x:2x2x1
jax: 0.10.0
libtpu: 0.0.40
codegen_flags: <defaults>
</compile_context>

<pallas_src>
import jax
import jax.numpy as jnp
from jax.experimental import pallas as pl
from jax.experimental.pallas import tpu as pltpu


def _round_up(n, m):
    return ((n + m - 1) // m) * m


def _attention_gate_kernel(g_ref, x_ref, wg_ref, wx_ref, bgx_ref,
                           wpsi_ref, bpsi_ref, out_ref):
    g = g_ref[...]                                            # (F_g, TN)
    x = x_ref[...]                                            # (F_l, TN)

    # Folded Conv1x1 + BN branches: channel mixing on the MXU, f32 accumulate,
    # single combined bias add.
    g1 = jnp.dot(wg_ref[...], g, preferred_element_type=jnp.float32)
    x1 = jnp.dot(wx_ref[...], x, preferred_element_type=jnp.float32)
    a = jnp.maximum(g1 + x1 + bgx_ref[...], 0.0)              # (F_int, TN) f32

    # psi head: Conv1x1(F_int -> 1) + BN + sigmoid.  exp and the reciprocal
    # both go to the EUP slot; VALU stays clear.
    s = jnp.dot(wpsi_ref[...], a, preferred_element_type=jnp.float32) + bpsi_ref[...]
    psi = pl.reciprocal(1.0 + jnp.exp(-s), approx=True)       # (1, TN) f32

    out_ref[...] = (x.astype(jnp.float32) * psi).astype(out_ref.dtype)


def _fold_conv_bn(w, b, gamma, beta, mean, var, eps):
    """Fold Conv1x1 weight/bias + BatchNorm (running stats) into one affine."""
    scale = gamma / jnp.sqrt(var + eps)
    w_eff = (w * scale[:, None]).astype(jnp.float32)
    b_eff = (scale * (b - mean) + beta).astype(jnp.float32)
    return w_eff, b_eff


def _pick_tile_n(n_pad, batch, per_col_bytes, target_tn, vmem_budget):
    """Largest lane-aligned TN that divides n_pad, fits the VMEM budget and
    leaves >= 2 total grid steps (so both v7x TensorCores get work)."""
    cap = max(128, (vmem_budget // per_col_bytes) // 128 * 128)
    target = min(target_tn, cap, n_pad)
    if batch * max(n_pad // max(target, 128), 1) < 2 and n_pad >= 256:
        target = min(target, n_pad // 2)
    m = n_pad // 128
    best = 1
    for d in range(1, m + 1):
        if m % d == 0 and d * 128 <= target:
            best = d
    return best * 128


def attention_gate(g, x, params, *, tile_n=4096,
                   compute_dtype=jnp.bfloat16,
                   vmem_budget_bytes=40 << 20):
    B, F_g, H, W = g.shape
    Bx, F_l, Hx, Wx = x.shape
    assert (B, H, W) == (Bx, Hx, Wx)
    F_int = params["wg_w"].shape[0]
    eps = params["bn_eps"]

    wg, bg = _fold_conv_bn(params["wg_w"], params["wg_b"], params["bng_gamma"],
                           params["bng_beta"], params["bng_mean"],
                           params["bng_var"], eps)
    wx, bx = _fold_conv_bn(params["wx_w"], params["wx_b"], params["bnx_gamma"],
                           params["bnx_beta"], params["bnx_mean"],
                           params["bnx_var"], eps)
    wp, bp = _fold_conv_bn(params["wpsi_w"], params["wpsi_b"], params["bnp_gamma"],
                           params["bnp_beta"], params["bnp_mean"],
                           params["bnp_var"], eps)

    wg = wg.astype(compute_dtype)                 # (F_int, F_g)
    wx = wx.astype(compute_dtype)                 # (F_int, F_l)
    bgx = (bg + bx).reshape(F_int, 1)             # combined branch bias (f32)
    wp = wp.astype(jnp.float32)                   # (1, F_int) tiny psi head in f32
    bp = bp.reshape(1, 1)

    # (B, C, H, W) is already channel-major / pixel-minor: reshape to
    # (B, C, N) is free.  Only the pixel axis is padded, only to 128 lanes.
    N = H * W
    N_pad = _round_up(N, 128)
    g_r = g.reshape(B, F_g, N).astype(compute_dtype)
    x_r = x.reshape(B, F_l, N).astype(compute_dtype)
    if N_pad != N:
        g_r = jnp.pad(g_r, ((0, 0), (0, 0), (0, N_pad - N)))
        x_r = jnp.pad(x_r, ((0, 0), (0, 0), (0, N_pad - N)))

    in_bytes = jnp.dtype(compute_dtype).itemsize
    out_bytes = in_bytes
    # Bytes of VMEM held live per pixel column during one grid step:
    # double-buffered g/x input tiles + double-buffered output tile
    # + f32 intermediates (g1, x1, a) + psi row / slack.
    per_col = (2 * (F_g + F_l) * in_bytes
               + 2 * F_l * out_bytes
               + 3 * F_int * 4 + 16)
    TN = _pick_tile_n(N_pad, B, per_col, tile_n, vmem_budget_bytes)

    weight_bytes = (wg.size + wx.size) * in_bytes + (bgx.size + wp.size + bp.size) * 4
    vmem_limit = int(min(max(per_col * TN + weight_bytes + (2 << 20), 16 << 20),
                         56 << 20))              # stays under v7x's 64 MiB VMEM

    out = pl.pallas_call(
        _attention_gate_kernel,
        out_shape=jax.ShapeDtypeStruct((B, F_l, N_pad), compute_dtype),
        grid=(B, N_pad // TN),
        in_specs=[
            pl.BlockSpec((pl.Squeezed(), F_g, TN), lambda b, i: (b, 0, i)),  # g tile
            pl.BlockSpec((pl.Squeezed(), F_l, TN), lambda b, i: (b, 0, i)),  # x tile
            pl.BlockSpec((F_int, F_g), lambda b, i: (0, 0)),                 # W_g (folded)
            pl.BlockSpec((F_int, F_l), lambda b, i: (0, 0)),                 # W_x (folded)
            pl.BlockSpec((F_int, 1), lambda b, i: (0, 0)),                   # b_g + b_x
            pl.BlockSpec((1, F_int), lambda b, i: (0, 0)),                   # w_psi (folded)
            pl.BlockSpec((1, 1), lambda b, i: (0, 0)),                       # b_psi
        ],
        out_specs=pl.BlockSpec((pl.Squeezed(), F_l, TN), lambda b, i: (b, 0, i)),
        compiler_params=pltpu.CompilerParams(
            dimension_semantics=("parallel", "parallel"),
            vmem_limit_bytes=vmem_limit),
    )(g_r, x_r, wg, wx, bgx, wp, bp)

    if N_pad != N:
        out = out[:, :, :N]
    return out.reshape(B, F_l, H, W)


def _reference_attention_gate(g, x, params):
    """Pure-JAX f32 reference reproducing the PyTorch module (eval-mode BN)."""
    eps = params["bn_eps"]

    def conv_bn(inp, w, b, gamma, beta, mean, var):
        y = jnp.einsum("oc,bchw->bohw", w, inp) + b[None, :, None, None]
        scale = gamma / jnp.sqrt(var + eps)
        return (scale[None, :, None, None] * (y - mean[None, :, None, None])
                + beta[None, :, None, None])

    g1 = conv_bn(g, params["wg_w"], params["wg_b"], params["bng_gamma"],
                 params["bng_beta"], params["bng_mean"], params["bng_var"])
    x1 = conv_bn(x, params["wx_w"], params["wx_b"], params["bnx_gamma"],
                 params["bnx_beta"], params["bnx_mean"], params["bnx_var"])
    a = jnp.maximum(g1 + x1, 0.0)
    s = conv_bn(a, params["wpsi_w"], params["wpsi_b"], params["bnp_gamma"],
                params["bnp_beta"], params["bnp_mean"], params["bnp_var"])
    psi = jax.nn.sigmoid(s)
    return x * psi


if __name__ == "__main__":
    key = jax.random.PRNGKey(0)
    ks = jax.random.split(key, 24)

    B, F_g, F_l, F_int, H, W = 2, 4, 4, 2, 16, 16

    g = jax.random.normal(ks[0], (B, F_g, H, W), dtype=jnp.float32)
    x = jax.random.normal(ks[1], (B, F_l, H, W), dtype=jnp.float32)

    def bn_params(k0, k1, k2, k3, c):
        return (1.0 + 0.1 * jax.random.normal(ks[k0], (c,), dtype=jnp.float32),  # gamma
                0.1 * jax.random.normal(ks[k1], (c,), dtype=jnp.float32),        # beta
                0.1 * jax.random.normal(ks[k2], (c,), dtype=jnp.float32),        # running_mean
                jnp.abs(1.0 + 0.1 * jax.random.normal(ks[k3], (c,))).astype(jnp.float32))  # running_var

    gng, gnb, gnm, gnv = bn_params(4, 5, 6, 7, F_int)
    xng, xnb, xnm, xnv = bn_params(8, 9, 10, 11, F_int)
    png, pnb, pnm, pnv = bn_params(12, 13, 14, 15, 1)

    params = {
        "wg_w": 0.5 * jax.random.normal(ks[2], (F_int, F_g), dtype=jnp.float32),
        "wg_b": 0.1 * jax.random.normal(ks[3], (F_int,), dtype=jnp.float32),
        "bng_gamma": gng, "bng_beta": gnb, "bng_mean": gnm, "bng_var": gnv,
        "wx_w": 0.5 * jax.random.normal(ks[16], (F_int, F_l), dtype=jnp.float32),
        "wx_b": 0.1 * jax.random.normal(ks[17], (F_int,), dtype=jnp.float32),
        "bnx_gamma": xng, "bnx_beta": xnb, "bnx_mean": xnm, "bnx_var": xnv,
        "wpsi_w": 0.5 * jax.random.normal(ks[18], (1, F_int), dtype=jnp.float32),
        "wpsi_b": 0.1 * jax.random.normal(ks[19], (1,), dtype=jnp.float32),
        "bnp_gamma": png, "bnp_beta": pnb, "bnp_mean": pnm, "bnp_var": pnv,
        "bn_eps": 1e-5,
    }

    out = attention_gate(g, x, params)            # grid = (B=2, pixel tiles)
    out = jax.block_until_ready(out)

    ref = jax.block_until_ready(_reference_attention_gate(g, x, params))
    assert out.shape == ref.shape, (out.shape, ref.shape)
    # Tolerance loosened because g/x/out stream in bfloat16 (perf feedback).
    err = float(jnp.max(jnp.abs(out.astype(jnp.float32) - ref)))
    assert jnp.allclose(out.astype(jnp.float32), ref, rtol=5e-2, atol=5e-2), err

    print("KERNEL_OK")
</pallas_src>

<mosaic_0001>
module attributes {stable_mosaic.version = 11 : i64} {
  func.func @_attention_gate_kernel(%arg0: i32, %arg1: i32, %arg2: memref<1x4x256xbf16, #tpu.memory_space<vmem>>, %arg3: memref<1x4x256xbf16, #tpu.memory_space<vmem>>, %arg4: memref<2x4xbf16, #tpu.memory_space<vmem>>, %arg5: memref<2x4xbf16, #tpu.memory_space<vmem>>, %arg6: memref<2x1xf32, #tpu.memory_space<vmem>>, %arg7: memref<1x2xf32, #tpu.memory_space<vmem>>, %arg8: memref<1x1xf32, #tpu.memory_space<vmem>>, %arg9: memref<1x4x256xbf16, #tpu.memory_space<vmem>>) attributes {dimension_semantics = [#tpu.dimension_semantics<parallel>, #tpu.dimension_semantics<parallel>], iteration_bounds = array<i64: 2, 1>, scalar_prefetch = 0 : i64, scratch_operands = 0 : i64, tpu.core_type = #tpu.core_type<tc>, window_params = [{transform_indices = @transform_0, window_bounds = array<i64: 1, 4, 256>}, {transform_indices = @transform_1, window_bounds = array<i64: 1, 4, 256>}, {pipeline_mode = #tpu.pipeline_mode<synchronous>, transform_indices = @transform_2, window_bounds = array<i64: 2, 4>}, {pipeline_mode = #tpu.pipeline_mode<synchronous>, transform_indices = @transform_3, window_bounds = array<i64: 2, 4>}, {pipeline_mode = #tpu.pipeline_mode<synchronous>, transform_indices = @transform_4, window_bounds = array<i64: 2, 1>}, {pipeline_mode = #tpu.pipeline_mode<synchronous>, transform_indices = @transform_5, window_bounds = array<i64: 1, 2>}, {pipeline_mode = #tpu.pipeline_mode<synchronous>, transform_indices = @transform_6, window_bounds = array<i64: 1, 1>}, {transform_indices = @transform_7, window_bounds = array<i64: 1, 4, 256>}]} {
    %c0 = arith.constant 0 : index
    %c0_0 = arith.constant 0 : index
    %c0_1 = arith.constant 0 : index
    %0 = vector.load %arg2[%c0, %c0_0, %c0_1] : memref<1x4x256xbf16, #tpu.memory_space<vmem>>, vector<1x4x256xbf16>
    %1 = vector.shape_cast %0 : vector<1x4x256xbf16> to vector<4x256xbf16>
    %c0_2 = arith.constant 0 : index
    %c0_3 = arith.constant 0 : index
    %c0_4 = arith.constant 0 : index
    %2 = vector.load %arg3[%c0_2, %c0_3, %c0_4] : memref<1x4x256xbf16, #tpu.memory_space<vmem>>, vector<1x4x256xbf16>
    %3 = vector.shape_cast %2 : vector<1x4x256xbf16> to vector<4x256xbf16>
    %c0_5 = arith.constant 0 : index
    %c0_6 = arith.constant 0 : index
    %4 = vector.load %arg4[%c0_5, %c0_6] : memref<2x4xbf16, #tpu.memory_space<vmem>>, vector<2x4xbf16>
    %cst = arith.constant dense<0.000000e+00> : vector<2x256xf32>
    %5 = tpu.matmul %4, %1, %cst {dimension_numbers = #tpu.dot_dimension_numbers<[1], [0], [0], [1], [0, 0, 1, 1], [], []>} : vector<2x4xbf16>, vector<4x256xbf16>, vector<2x256xf32> -> vector<2x256xf32>
    %c0_7 = arith.constant 0 : index
    %c0_8 = arith.constant 0 : index
    %6 = vector.load %arg5[%c0_7, %c0_8] : memref<2x4xbf16, #tpu.memory_space<vmem>>, vector<2x4xbf16>
    %cst_9 = arith.constant dense<0.000000e+00> : vector<2x256xf32>
    %7 = tpu.matmul %6, %3, %cst_9 {dimension_numbers = #tpu.dot_dimension_numbers<[1], [0], [0], [1], [0, 0, 1, 1], [], []>} : vector<2x4xbf16>, vector<4x256xbf16>, vector<2x256xf32> -> vector<2x256xf32>
    %8 = arith.addf %5, %7 : vector<2x256xf32>
    %c0_10 = arith.constant 0 : index
    %c0_11 = arith.constant 0 : index
    %9 = vector.load %arg6[%c0_10, %c0_11] : memref<2x1xf32, #tpu.memory_space<vmem>>, vector<2x1xf32>
    %10 = vector.broadcast %9 : vector<2x1xf32> to vector<2x256xf32>
    %11 = arith.addf %8, %10 : vector<2x256xf32>
    %cst_12 = arith.constant 0.000000e+00 : f32
    %12 = vector.broadcast %cst_12 : f32 to vector<2x256xf32>
    %13 = arith.maximumf %11, %12 : vector<2x256xf32>
    %c0_13 = arith.constant 0 : index
    %c0_14 = arith.constant 0 : index
    %14 = vector.load %arg7[%c0_13, %c0_14] : memref<1x2xf32, #tpu.memory_space<vmem>>, vector<1x2xf32>
    %cst_15 = arith.constant dense<0.000000e+00> : vector<1x256xf32>
    %15 = tpu.matmul %14, %13, %cst_15 {dimension_numbers = #tpu.dot_dimension_numbers<[1], [0], [0], [1], [0, 0, 1, 1], [], []>} : vector<1x2xf32>, vector<2x256xf32>, vector<1x256xf32> -> vector<1x256xf32>
    %c0_16 = arith.constant 0 : index
    %c0_17 = arith.constant 0 : index
    %16 = vector.load %arg8[%c0_16, %c0_17] : memref<1x1xf32, #tpu.memory_space<vmem>>, vector<1x1xf32>
    %17 = vector.broadcast %16 : vector<1x1xf32> to vector<1x256xf32>
    %18 = arith.addf %15, %17 : vector<1x256xf32>
    %cst_18 = arith.constant 0.000000e+00 : f32
    %19 = vector.broadcast %cst_18 : f32 to vector<1x256xf32>
    %20 = arith.subf %19, %18 : vector<1x256xf32>
    %21 = math.exp %20 : vector<1x256xf32>
    %cst_19 = arith.constant 1.000000e+00 : f32
    %22 = vector.broadcast %cst_19 : f32 to vector<1x256xf32>
    %23 = arith.addf %22, %21 : vector<1x256xf32>
    %24 = tpu.reciprocal %23 {approx = true} : vector<1x256xf32> -> vector<1x256xf32>
    %25 = arith.extf %3 : vector<4x256xbf16> to vector<4x256xf32>
    %26 = vector.broadcast %24 : vector<1x256xf32> to vector<4x256xf32>
    %27 = arith.mulf %25, %26 : vector<4x256xf32>
    %28 = arith.truncf %27 : vector<4x256xf32> to vector<4x256xbf16>
    %c0_20 = arith.constant 0 : index
    %c0_21 = arith.constant 0 : index
    %c0_22 = arith.constant 0 : index
    %29 = vector.load %arg9[%c0_20, %c0_21, %c0_22] : memref<1x4x256xbf16, #tpu.memory_space<vmem>>, vector<1x4x256xbf16>
    %30 = vector.shape_cast %29 : vector<1x4x256xbf16> to vector<4x256xbf16>
    %31 = vector.shape_cast %28 : vector<4x256xbf16> to vector<1x4x256xbf16>
    tpu.vector_store %arg9[%c0_20, %c0_21, %c0_22], %31 {strides = array<i32>} : memref<1x4x256xbf16, #tpu.memory_space<vmem>>, vector<1x4x256xbf16>,
    return
  }
  func.func @transform_0(%arg0: i32, %arg1: i32) -> (i32, i32, i32) {
    %c0_i32 = arith.constant 0 : i32
    %c0_i32_0 = arith.constant 0 : i32
    return %arg0, %c0_i32, %arg1 : i32, i32, i32
  }
  func.func @transform_1(%arg0: i32, %arg1: i32) -> (i32, i32, i32) {
    %c0_i32 = arith.constant 0 : i32
    %c0_i32_0 = arith.constant 0 : i32
    return %arg0, %c0_i32, %arg1 : i32, i32, i32
  }
  func.func @transform_2(%arg0: i32, %arg1: i32) -> (i32, i32) {
    %c0_i32 = arith.constant 0 : i32
    %c0_i32_0 = arith.constant 0 : i32
    %c0_i32_1 = arith.constant 0 : i32
    return %c0_i32, %c0_i32_0 : i32, i32
  }
  func.func @transform_3(%arg0: i32, %arg1: i32) -> (i32, i32) {
    %c0_i32 = arith.constant 0 : i32
    %c0_i32_0 = arith.constant 0 : i32
    %c0_i32_1 = arith.constant 0 : i32
    return %c0_i32, %c0_i32_0 : i32, i32
  }
  func.func @transform_4(%arg0: i32, %arg1: i32) -> (i32, i32) {
    %c0_i32 = arith.constant 0 : i32
    %c0_i32_0 = arith.constant 0 : i32
    %c0_i32_1 = arith.constant 0 : i32
    return %c0_i32, %c0_i32_0 : i32, i32
  }
  func.func @transform_5(%arg0: i32, %arg1: i32) -> (i32, i32) {
    %c0_i32 = arith.constant 0 : i32
    %c0_i32_0 = arith.constant 0 : i32
    %c0_i32_1 = arith.constant 0 : i32
    return %c0_i32, %c0_i32_0 : i32, i32
  }
  func.func @transform_6(%arg0: i32, %arg1: i32) -> (i32, i32) {
    %c0_i32 = arith.constant 0 : i32
    %c0_i32_0 = arith.constant 0 : i32
    %c0_i32_1 = arith.constant 0 : i32
    return %c0_i32, %c0_i32_0 : i32, i32
  }
  func.func @transform_7(%arg0: i32, %arg1: i32) -> (i32, i32, i32) {
    %c0_i32 = arith.constant 0 : i32
    %c0_i32_0 = arith.constant 0 : i32
    return %arg0, %c0_i32, %arg1 : i32, i32, i32
  }
}

</mosaic_0001>

<llo_original>
// kernel: tpu_custom_call.1
$region0: #{tpu_custom_call.1}
  #allocation0 [shape = 'u32[]', space=smem, size = 0x4, offset = 0x4, fixed_abs, tag = 'smem constant byte address 0x4 - core index']
  #allocation1 [shape = 'u32[144,128]{1,0:T(1,128)}', space=vmem, size = 0x12000, scoped, tag = 'internal scratch']
  #allocation2 [shape = 'f32[1,1]{1,0:T(1,128)S(1)}', space=vmem, size = 0x200, scoped, tag = 'scoped memory for tpu_custom_call.1']
  %s0 = inlined_call_operand.hbm [shape: bf16[2,4,256], index: 0, kind: input, shape index: {}]
  %s1 = inlined_call_operand.vmem [shape: bf16[2,4,256], index: 1, kind: input, shape index: {}]
  %s2 = inlined_call_operand.vmem [shape: bf16[2,4], index: 2, kind: input, shape index: {}]
  %s3 = inlined_call_operand.vmem [shape: bf16[2,4], index: 3, kind: input, shape index: {}]
  %s4 = inlined_call_operand.vmem [shape: f32[2,1], index: 4, kind: input, shape index: {}]
  %s5 = inlined_call_operand.vmem [shape: f32[1,2], index: 5, kind: input, shape index: {}]
  %s6 = inlined_call_operand.<no memory space> [shape: f32[1,1], index: 6, kind: input, shape index: {}]
  %s7 = inlined_call_operand.hbm [shape: bf16[2,4,256], index: 7, kind: output, shape index: {}]
  %s8 = sld [smem:[#allocation0]]
  $region65: #{tpu_custom_call.1} parent=0
    _
  %s10 = ssub.s32 1, %s8
  %s11 = scalar_select 0, %s10, %s8
  %v12 = vstv %s6
  %13 = vst [vmem:[#allocation2] sm:$0x1] %v12
  $region1: #{tpu_custom_call.1} parent=0
    #allocation3 [shape = 'u8[4096]{0}', space=vmem, size = 0x1000, scoped, tag = 'input window, operand 0']
    #allocation4 [shape = 's32[2]{0}', space=sflag, size = 0x8, scoped, tag = 'scoped memory for tpu_custom_call.1']
    #allocation5 [shape = 's32[2]{0}', space=sflag, size = 0x8, scoped, tag = 'scoped memory for tpu_custom_call.1']
    #allocation6 [shape = 'u8[4096]{0}', space=vmem, size = 0x1000, scoped, tag = 'output window, operand 0']
    %14 = vsyncpa [#allocation4], 0
    %s15 = scalar_lea.sflag [#allocation4], 1
    %16 = vsyncpa %s15, 0
    %17 = vsyncpa [#allocation5], 0
    %s18 = scalar_lea.sflag [#allocation5], 1
    %19 = vsyncpa %s18, 0
    loop: start=0, step=1, limit=4
    $region2: #{tpu_custom_call.1} parent=1 // loop_pre_header
      _
    $region3: #{tpu_custom_call.1} parent=1 // loop_header
      %s21 = sphi 0, %s25
      %p22 = scmp.ge.s32.totalorder %s21, 4
      %s28 = sphi 0, %s40
      %s29 = sphi 0, %s36
      %s30 = sphi 0, %s28
      %s31 = sphi 0, %s29
      %s32 = sphi 0, %s30
      %s33 = sphi 0, %s31
      %s45 = sphi 0, %s47
      %s48 = sphi 0, %s45
      %s49 = sphi 0, %s48
      %s65 = sphi 0, %s49
      %s73 = sphi 0, %s75
      %s76 = sphi 0, %s73
      %s77 = sphi 0, %s76
      %s93 = sphi 0, %s77
      %s97 = sphi 0, %s97
      %s99 = sphi 0, %s97
      %s100 = sphi 0, %s99
      %s114 = sphi 0, %s100
      %s118 = sphi 0, %s118
      %s120 = sphi 0, %s118
      %s121 = sphi 0, %s120
      %s135 = sphi 0, %s121
      %s139 = sphi 0, %s139
      %s141 = sphi 0, %s139
      %s142 = sphi 0, %s141
      %s156 = sphi 0, %s142
      %s160 = sphi 0, %s160
      %s162 = sphi 0, %s160
      %s163 = sphi 0, %s162
      %s177 = sphi 0, %s163
      %s181 = sphi 0, %s181
      %s183 = sphi 0, %s181
      %s184 = sphi 0, %s183
      %s198 = sphi 0, %s184
      %s206 = sphi 0, %s208
      %s209 = sphi 0, %s206
      %s210 = sphi 0, %s209
      %s226 = sphi 0, %s210
    $region4: #{tpu_custom_call.1} parent=1 // loop_header_branch
      %24 = sbr.rel (%p22) target = $region8
    $region5: #{tpu_custom_call.1} parent=1 // loop_body
      %s26 = ssub.s32 %s21, 1
      %s27 = ssub.s32 %s21, 2
      %s34 = sadd.s32 1, %s29
      %p35 = scmp.ge.s32.totalorder %s34, 1
      %s36 = scalar_select %p35, 0, %s34
      %s37 = sadd.s32 1, %s28
      %s38 = scalar_select %p35, %s37, %s28
      %p39 = scmp.ge.s32.totalorder %s38, 2
      %s40 = scalar_select %p39, 0, %s38
      %s41 = ssub.s32 %s28, %s40
      %s42 = ssub.s32 %s29, %s36
      %s43 = sor.u32 %s41, %s42
      %p44 = scmp.eq.s32.totalorder %s43, 0
      %s46 = sadd.s32 %s45, 1
      %s47 = scalar_select %p44, %s45, %s46
      %p50 = pneg %p44
      %p51 = scmp.eq.s32.totalorder %s21, 1
      %p52 = por %p50, %p51
      %p53 = scmp.ne.s32.totalorder %s45, %s48
      %p54 = scmp.eq.s32.totalorder %s21, 0
      %p55 = por %p53, %p54
      %p56 = scmp.ne.s32.totalorder %s45, %s48
      %p57 = scmp.eq.s32.totalorder %s26, 1
      %p58 = por %p56, %p57
      %p59 = scmp.ne.s32.totalorder %s48, %s49
      %p60 = scmp.eq.s32.totalorder %s26, 0
      %p61 = por %p59, %p60
      %p62 = scmp.ne.s32.totalorder %s48, %s49
      %p63 = scmp.eq.s32.totalorder %s27, 1
      %p64 = por %p62, %p63
      %p66 = scmp.ne.s32.totalorder %s49, %s65
      %p67 = scmp.eq.s32.totalorder %s27, 0
      %p68 = por %p66, %p67
      %s69 = ssub.s32 %s28, %s40
      %s70 = ssub.s32 %s29, %s36
      %s71 = sor.u32 %s69, %s70
      %p72 = scmp.eq.s32.totalorder %s71, 0
      %s74 = sadd.s32 %s73, 1
      %s75 = scalar_select %p72, %s73, %s74
      %p78 = pneg %p72
      %p79 = scmp.eq.s32.totalorder %s21, 1
      %p80 = por %p78, %p79
      %p81 = scmp.ne.s32.totalorder %s73, %s76
      %p82 = scmp.eq.s32.totalorder %s21, 0
      %p83 = por %p81, %p82
      %p84 = scmp.ne.s32.totalorder %s73, %s76
      %p85 = scmp.eq.s32.totalorder %s26, 1
      %p86 = por %p84, %p85
      %p87 = scmp.ne.s32.totalorder %s76, %s77
      %p88 = scmp.eq.s32.totalorder %s26, 0
      %p89 = por %p87, %p88
      %p90 = scmp.ne.s32.totalorder %s76, %s77
      %p91 = scmp.eq.s32.totalorder %s27, 1
      %p92 = por %p90, %p91
      %p94 = scmp.ne.s32.totalorder %s77, %s93
      %p95 = scmp.eq.s32.totalorder %s27, 0
      %p96 = por %p94, %p95
      %s98 = sadd.s32 %s97, 1
      %p101 = scmp.eq.s32.totalorder %s21, 1
      %p102 = scmp.ne.s32.totalorder %s97, %s99
      %p103 = scmp.eq.s32.totalorder %s21, 0
      %p104 = por %p102, %p103
      %p105 = scmp.ne.s32.totalorder %s97, %s99
      %p106 = scmp.eq.s32.totalorder %s26, 1
      %p107 = por %p105, %p106
      %p108 = scmp.ne.s32.totalorder %s99, %s100
      %p109 = scmp.eq.s32.totalorder %s26, 0
      %p110 = por %p108, %p109
      %p111 = scmp.ne.s32.totalorder %s99, %s100
      %p112 = scmp.eq.s32.totalorder %s27, 1
      %p113 = por %p111, %p112
      %p115 = scmp.ne.s32.totalorder %s100, %s114
      %p116 = scmp.eq.s32.totalorder %s27, 0
      %p117 = por %p115, %p116
      %s119 = sadd.s32 %s118, 1
      %p122 = scmp.eq.s32.totalorder %s21, 1
      %p123 = scmp.ne.s32.totalorder %s118, %s120
      %p124 = scmp.eq.s32.totalorder %s21, 0
      %p125 = por %p123, %p124
      %p126 = scmp.ne.s32.totalorder %s118, %s120
      %p127 = scmp.eq.s32.totalorder %s26, 1
      %p128 = por %p126, %p127
      %p129 = scmp.ne.s32.totalorder %s120, %s121
      %p130 = scmp.eq.s32.totalorder %s26, 0
      %p131 = por %p129, %p130
      %p132 = scmp.ne.s32.totalorder %s120, %s121
      %p133 = scmp.eq.s32.totalorder %s27, 1
      %p134 = por %p132, %p133
      %p136 = scmp.ne.s32.totalorder %s121, %s135
      %p137 = scmp.eq.s32.totalorder %s27, 0
      %p138 = por %p136, %p137
      %s140 = sadd.s32 %s139, 1
      %p143 = scmp.eq.s32.totalorder %s21, 1
      %p144 = scmp.ne.s32.totalorder %s139, %s141
      %p145 = scmp.eq.s32.totalorder %s21, 0
      %p146 = por %p144, %p145
      %p147 = scmp.ne.s32.totalorder %s139, %s141
      %p148 = scmp.eq.s32.totalorder %s26, 1
      %p149 = por %p147, %p148
      %p150 = scmp.ne.s32.totalorder %s141, %s142
      %p151 = scmp.eq.s32.totalorder %s26, 0
      %p152 = por %p150, %p151
      %p153 = scmp.ne.s32.totalorder %s141, %s142
      %p154 = scmp.eq.s32.totalorder %s27, 1
      %p155 = por %p153, %p154
      %p157 = scmp.ne.s32.totalorder %s142, %s156
      %p158 = scmp.eq.s32.totalorder %s27, 0
      %p159 = por %p157, %p158
      %s161 = sadd.s32 %s160, 1
      %p164 = scmp.eq.s32.totalorder %s21, 1
      %p165 = scmp.ne.s32.totalorder %s160, %s162
      %p166 = scmp.eq.s32.totalorder %s21, 0
      %p167 = por %p165, %p166
      %p168 = scmp.ne.s32.totalorder %s160, %s162
      %p169 = scmp.eq.s32.totalorder %s26, 1
      %p170 = por %p168, %p169
      %p171 = scmp.ne.s32.totalorder %s162, %s163
      %p172 = scmp.eq.s32.totalorder %s26, 0
      %p173 = por %p171, %p172
      %p174 = scmp.ne.s32.totalorder %s162, %s163
      %p175 = scmp.eq.s32.totalorder %s27, 1
      %p176 = por %p174, %p175
      %p178 = scmp.ne.s32.totalorder %s163, %s177
      %p179 = scmp.eq.s32.totalorder %s27, 0
      %p180 = por %p178, %p179
      %s182 = sadd.s32 %s181, 1
      %p185 = scmp.eq.s32.totalorder %s21, 1
      %p186 = scmp.ne.s32.totalorder %s181, %s183
      %p187 = scmp.eq.s32.totalorder %s21, 0
      %p188 = por %p186, %p187
      %p189 = scmp.ne.s32.totalorder %s181, %s183
      %p190 = scmp.eq.s32.totalorder %s26, 1
      %p191 = por %p189, %p190
      %p192 = scmp.ne.s32.totalorder %s183, %s184
      %p193 = scmp.eq.s32.totalorder %s26, 0
      %p194 = por %p192, %p193
      %p195 = scmp.ne.s32.totalorder %s183, %s184
      %p196 = scmp.eq.s32.totalorder %s27, 1
      %p197 = por %p195, %p196
      %p199 = scmp.ne.s32.totalorder %s184, %s198
      %p200 = scmp.eq.s32.totalorder %s27, 0
      %p201 = por %p199, %p200
      %s202 = ssub.s32 %s28, %s40
      %s203 = ssub.s32 %s29, %s36
      %s204 = sor.u32 %s202, %s203
      %p205 = scmp.eq.s32.totalorder %s204, 0
      %s207 = sadd.s32 %s206, 1
      %s208 = scalar_select %p205, %s206, %s207
      %p211 = pneg %p205
      %p212 = scmp.eq.s32.totalorder %s21, 1
      %p213 = por %p211, %p212
      %p214 = scmp.ne.s32.totalorder %s206, %s209
      %p215 = scmp.eq.s32.totalorder %s21, 0
      %p216 = por %p214, %p215
      %p217 = scmp.ne.s32.totalorder %s206, %s209
      %p218 = scmp.eq.s32.totalorder %s26, 1
      %p219 = por %p217, %p218
      %p220 = scmp.ne.s32.totalorder %s209, %s210
      %p221 = scmp.eq.s32.totalorder %s26, 0
      %p222 = por %p220, %p221
      %p223 = scmp.ne.s32.totalorder %s209, %s210
      %p224 = scmp.eq.s32.totalorder %s27, 1
      %p225 = por %p223, %p224
      %p227 = scmp.ne.s32.totalorder %s210, %s226
      %p228 = scmp.eq.s32.totalorder %s27, 0
      %p229 = por %p227, %p228
      %p230 = scmp.le.s32.totalorder 1, %s21
      %p231 = scmp.lt.s32.totalorder %s21, 3
      %p232 = pnand %p230, %p231
      %p233 = pneg %p232
      // Predicated region
      $region9: #{tpu_custom_call.1} parent=5 // pred_check
        _
      $region10: #{tpu_custom_call.1} parent=5 // pred_check_branch
        %235 = sbr.rel (%p232) target = $region12
      $region11: #{tpu_custom_call.1} parent=5 // pred_region
        %s236 = ssub.s32 %s21, 1
        // Predicated region
        $region13: #{tpu_custom_call.1} parent=11 // pred_check
          %p237 = pneg %p110
        $region14: #{tpu_custom_call.1} parent=11 // pred_check_branch
          %239 = sbr.rel (%p237) target = $region16
        $region15: #{tpu_custom_call.1} parent=11 // pred_region
          _
        $region16: #{tpu_custom_call.1} parent=11 // pred_fallthru
          _
        // Predicated region
        $region17: #{tpu_custom_call.1} parent=11 // pred_check
          %p240 = pneg %p131
        $region18: #{tpu_custom_call.1} parent=11 // pred_check_branch
          %242 = sbr.rel (%p240) target = $region20
        $region19: #{tpu_custom_call.1} parent=11 // pred_region
          _
        $region20: #{tpu_custom_call.1} parent=11 // pred_fallthru
          _
        // Predicated region
        $region21: #{tpu_custom_call.1} parent=11 // pred_check
          %p243 = pneg %p152
        $region22: #{tpu_custom_call.1} parent=11 // pred_check_branch
          %245 = sbr.rel (%p243) target = $region24
        $region23: #{tpu_custom_call.1} parent=11 // pred_region
          _
        $region24: #{tpu_custom_call.1} parent=11 // pred_fallthru
          _
        // Predicated region
        $region25: #{tpu_custom_call.1} parent=11 // pred_check
          %p246 = pneg %p173
        $region26: #{tpu_custom_call.1} parent=11 // pred_check_branch
          %248 = sbr.rel (%p246) target = $region28
        $region27: #{tpu_custom_call.1} parent=11 // pred_region
          _
        $region28: #{tpu_custom_call.1} parent=11 // pred_fallthru
          _
        // Predicated region
        $region29: #{tpu_custom_call.1} parent=11 // pred_check
          %p249 = pneg %p194
        $region30: #{tpu_custom_call.1} parent=11 // pred_check_branch
          %251 = sbr.rel (%p249) target = $region32
        $region31: #{tpu_custom_call.1} parent=11 // pred_region
          _
        $region32: #{tpu_custom_call.1} parent=11 // pred_fallthru
          _
      $region12: #{tpu_custom_call.1} parent=5 // pred_fallthru
        _
      %p252 = scmp.lt.s32.totalorder %s21, 2
      // Predicated region
      $region33: #{tpu_custom_call.1} parent=5 // pred_check
        %p253 = pneg %p252
      $region34: #{tpu_custom_call.1} parent=5 // pred_check_branch
        %255 = sbr.rel (%p253) target = $region36
      $region35: #{tpu_custom_call.1} parent=5 // pred_region
        // Predicated region
        $region37: #{tpu_custom_call.1} parent=35 // pred_check
          %p256 = pneg %p55
        $region38: #{tpu_custom_call.1} parent=35 // pred_check_branch
          %258 = sbr.rel (%p256) target = $region40
        $region39: #{tpu_custom_call.1} parent=35 // pred_region
          %s259 = sand.u32 %s45, 1
          %s260 = scalar_lea.sflag [#allocation4], %s259
          %s261 = sand.u32 %s45, 1
          %s262 = smul.addr %s261, 4
          %s263 = scalar_lea.vmem [#allocation3], %s262
          %s264 = smul.u32 2, %s29
          %s266 = ssub.s32 64, 64
          %267 = vsyncadd %s260, %s266
          %s268 = smul.addr %s28, 2
          %s269 = sadd.s32 %s264, %s268
          %s270 = smul.addr %s269, 32
          %s271 = scalar_lea.hbm %s0, %s270
          %s273 = sshll.u32 %s263, 4
          %s274 = int_to_ptr.vmem [resolvable:$true] %s273
          %276 = dma.hbm_to_vmem [thread:$0]  %s271, 64, %s274, %s260
        $region40: #{tpu_custom_call.1} parent=35 // pred_fallthru
          _
        // Predicated region
        $region41: #{tpu_custom_call.1} parent=35 // pred_check
          %p277 = pneg %p83
        $region42: #{tpu_custom_call.1} parent=35 // pred_check_branch
          %279 = sbr.rel (%p277) target = $region44
        $region43: #{tpu_custom_call.1} parent=35 // pred_region
          %s280 = smul.u32 2, %s29
          %p281 = scmp.lt.s32.totalorder %s28, 1
          %s282 = scalar_select %p281, %s28, 1
          %p283 = scmp.lt.s32.totalorder %s280, 1
          %s284 = scalar_select %p283, %s280, 1
          %s285 = smul.addr %s282, 2
          %s286 = sadd.s32 %s284, %s285
          %s287 = smul.addr %s286, 2
          %s288 = scalar_lea.vmem %s1, %s287
          %s289 = smul.u32 2, %s29
        $region44: #{tpu_custom_call.1} parent=35 // pred_fallthru
          _
      $region36: #{tpu_custom_call.1} parent=5 // pred_fallthru
        _
      %p290 = scmp.le.s32.totalorder 1, %s21
      %p291 = scmp.lt.s32.totalorder %s21, 3
      %p292 = pnand %p290, %p291
      %p293 = pneg %p292
      // Predicated region
      $region45: #{tpu_custom_call.1} parent=5 // pred_check
        _
      $region46: #{tpu_custom_call.1} parent=5 // pred_check_branch
        %295 = sbr.rel (%p292) target = $region48
      $region47: #{tpu_custom_call.1} parent=5 // pred_region
        %s296 = ssub.s32 %s21, 1
        %s297 = sand.u32 %s48, 1
        %s298 = scalar_lea.sflag [#allocation4], %s297
        %s299 = sand.u32 %s48, 1
        %s300 = smul.addr %s299, 4
        %s301 = scalar_lea.vmem [#allocation3], %s300
        // Predicated region
        $region49: #{tpu_custom_call.1} parent=47 // pred_check
          %p302 = pneg %p61
        $region50: #{tpu_custom_call.1} parent=47 // pred_check_branch
          %304 = sbr.rel (%p302) target = $region52
        $region51: #{tpu_custom_call.1} parent=47 // pred_region
          %305 = dma.done %s298, 64
        $region52: #{tpu_custom_call.1} parent=47 // pred_fallthru
          _
        %s306 = sand.u32 %s48, 1
        %s307 = scalar_lea.sflag [#allocation4], %s306
        %s308 = sand.u32 %s48, 1
        %s309 = smul.addr %s308, 4
        %s310 = scalar_lea.vmem [#allocation3], %s309
        %p311 = pneg %p61
        %p312 = pneg %p58
        %s313 = smul.u32 2, %s31
        %p314 = scmp.lt.s32.totalorder %s30, 1
        %s315 = scalar_select %p314, %s30, 1
        %p316 = scmp.lt.s32.totalorder %s313, 1
        %s317 = scalar_select %p316, %s313, 1
        %s318 = smul.addr %s315, 2
        %s319 = sadd.s32 %s317, %s318
        %s320 = smul.addr %s319, 2
        %s321 = scalar_lea.vmem %s1, %s320
        %p322 = pneg %p89
        %p323 = pneg %p86
        %p324 = pneg %p110
        %p325 = pneg %p107
        %p326 = pneg %p131
        %p327 = pneg %p128
        %p328 = pneg %p152
        %p329 = pneg %p149
        %p330 = pneg %p173
        %p331 = pneg %p170
        %p332 = pneg %p194
        %p333 = pneg %p191
        %p334 = pneg %p222
        %p335 = pneg %p219
        %s336 = sand.u32 %s209, 1
        %s337 = scalar_lea.sflag [#allocation5], %s336
        %s338 = sand.u32 %s209, 1
        %s339 = smul.addr %s338, 4
        %s340 = scalar_lea.vmem [#allocation6], %s339
        %s341 = smul.u32 2, %s31
        %s342 = smul.u32 2, %s31
        %p343 = scmp.lt.s32.totalorder %s30, 1
        %s344 = scalar_select %p343, %s30, 1
        %p345 = scmp.lt.s32.totalorder %s342, 1
        %s346 = scalar_select %p345, %s342, 1
        %s347 = smul.addr %s344, 2
        %s348 = sadd.s32 %s346, %s347
        %s349 = smul.addr %s348, 2
        %s350 = scalar_lea.vmem %s1, %s349
        %s351 = smul.u32 2, %s31
        %s352 = smul.u32 2, %s31
        %v354 = vld [vmem:[%s301] sm:$0xf]
        %v355 = vld [vmem:[%s350] sm:$0xf]
        %v356 = vld [vmem:[%s2] sm:$0x1]
        %v357 = vld [vmem:[%s3] sm:$0x1]
        %v360 = vunpack.c.l.s4 1983009808
        %v361 = vunpack.c.0.s8 %v360
        %v362 = vlaneseq
        %v363 = vshrl.u32 %v362, 7
        %v364 = vsub.s32 %v361, %v363
        %v365 = vrot.slane %v355, %v364
        %v366 = vcombine.high %v365, %v365
        %vm367 = vcmask 31744
        %v369 = vsel %vm367, %v357, 0
        %vm371 = vcmask 1041408
        %v373 = vsel %vm371, %v365, 0
        %v376 = vsel %vm371, %v366, 0
        %378 = vmatprep.subr.bf16.mxu0 %v376
        %379 = vmatpush1.bf16.msra.mxu0 %v373
        %380 = vmatprep.subr.bf16.mxu0 0
        %381 = vmatpush1.bf16.msra.mxu0 0
        %382 = vmatprep.subr.bf16.mxu0 0
        %383 = vmatpush1.bf16.msra.mxu0 0
        %384 = vmatprep.subr.bf16.mxu0 0
        %385 = vmatpush1.bf16.msra.mxu0 0
        %386 = vmatprep.subr.bf16.mxu0 0
        %387 = vmatpush1.bf16.msra.mxu0 0
        %388 = vmatprep.subr.bf16.mxu0 0
        %389 = vmatpush1.bf16.msra.mxu0 0
        %390 = vmatprep.subr.bf16.mxu0 0
        %391 = vmatpush1.bf16.msra.mxu0 0
        %392 = vmatprep.subr.bf16.mxu0 0
        %393 = vmatpush1.bf16.msra.mxu0 0
        %394 = vmatprep.subr.bf16.mxu0 0
        %395 = vmatpush1.bf16.msra.mxu0 0
        %396 = vmatprep.subr.bf16.mxu0 0
        %397 = vmatpush1.bf16.msra.mxu0 0
        %398 = vmatprep.subr.bf16.mxu0 0
        %399 = vmatpush1.bf16.msra.mxu0 0
        %400 = vmatprep.subr.bf16.mxu0 0
        %401 = vmatpush1.bf16.msra.mxu0 0
        %402 = vmatprep.subr.bf16.mxu0 0
        %403 = vmatpush1.bf16.msra.mxu0 0
        %404 = vmatprep.subr.bf16.mxu0 0
        %405 = vmatpush1.bf16.msra.mxu0 0
        %406 = vmatprep.subr.bf16.mxu0 0
        %407 = vmatpush1.bf16.msra.mxu0 0
        %408 = vmatprep.subr.bf16.mxu0 0
        %409 = vmatpush1.bf16.msra.mxu0 0
        %410 = vmatprep.mubr.bf16.mxu0 0
        %411 = vmatmul.mubr.bf16.gmra.mrb[0].mxu0 %v369
        %v412 = vpop.f32.mrb[0].mxu0
        %v413 = vadd.f32 0.0, %v412
        %v414 = vpop.f32.mrb[0].mxu0
        %v415 = vadd.f32 0.0, %v414
        %v416 = vpop.f32.mrb[0].mxu0
        %v417 = vpop.f32.mrb[0].mxu0
        %418 = vdwg.mxu0
        %v421 = vunpack.c.l.s4 1983009808
        %v422 = vunpack.c.0.s8 %v421
        %v423 = vlaneseq
        %v424 = vshrl.u32 %v423, 7
        %v425 = vsub.s32 %v422, %v424
        %v426 = vrot.slane %v354, %v425
        %v427 = vcombine.high %v426, %v426
        %v429 = vsel %vm367, %v356, 0
        %v432 = vsel %vm371, %v426, 0
        %v435 = vsel %vm371, %v427, 0
        %437 = vmatprep.subr.bf16.mxu0 %v435
        %438 = vmatpush1.bf16.msra.mxu0 %v432
        %439 = vmatprep.subr.bf16.mxu0 0
        %440 = vmatpush1.bf16.msra.mxu0 0
        %441 = vmatprep.subr.bf16.mxu0 0
        %442 = vmatpush1.bf16.msra.mxu0 0
        %443 = vmatprep.subr.bf16.mxu0 0
        %444 = vmatpush1.bf16.msra.mxu0 0
        %445 = vmatprep.subr.bf16.mxu0 0
        %446 = vmatpush1.bf16.msra.mxu0 0
        %447 = vmatprep.subr.bf16.mxu0 0
        %448 = vmatpush1.bf16.msra.mxu0 0
        %449 = vmatprep.subr.bf16.mxu0 0
        %450 = vmatpush1.bf16.msra.mxu0 0
        %451 = vmatprep.subr.bf16.mxu0 0
        %452 = vmatpush1.bf16.msra.mxu0 0
        %453 = vmatprep.subr.bf16.mxu0 0
        %454 = vmatpush1.bf16.msra.mxu0 0
        %455 = vmatprep.subr.bf16.mxu0 0
        %456 = vmatpush1.bf16.msra.mxu0 0
        %457 = vmatprep.subr.bf16.mxu0 0
        %458 = vmatpush1.bf16.msra.mxu0 0
        %459 = vmatprep.subr.bf16.mxu0 0
        %460 = vmatpush1.bf16.msra.mxu0 0
        %461 = vmatprep.subr.bf16.mxu0 0
        %462 = vmatpush1.bf16.msra.mxu0 0
        %463 = vmatprep.subr.bf16.mxu0 0
        %464 = vmatpush1.bf16.msra.mxu0 0
        %465 = vmatprep.subr.bf16.mxu0 0
        %466 = vmatpush1.bf16.msra.mxu0 0
        %467 = vmatprep.subr.bf16.mxu0 0
        %468 = vmatpush1.bf16.msra.mxu0 0
        %469 = vmatprep.mubr.bf16.mxu0 0
        %470 = vmatmul.mubr.bf16.gmra.mrb[0].mxu0 %v429
        %v471 = vpop.f32.mrb[0].mxu0
        %v472 = vadd.f32 %v413, %v471
        %v473 = vpop.f32.mrb[0].mxu0
        %v474 = vadd.f32 %v415, %v473
        %v475 = vpop.f32.mrb[0].mxu0
        %v476 = vpop.f32.mrb[0].mxu0
        %477 = vdwg.mxu0
        %v478 = vld [vmem:[%s4] sm:$0x3]
        %480 = vset.pattern.permute.xlu0 0
        %481 = vperm.xlu0 %480, %v478
        %v482 = vpop.permute.xlu0 %481
        %v484 = vadd.f32 %v472, %v482
        %v485 = vadd.f32 %v474, %v482
        %v486 = vmax.f32 %v484, 0.0
        %v487 = vmax.f32 %v485, 0.0
        %v488 = vld [vmem:[%s5] sm:$0x1]
        %v489 = vld [vmem:[#allocation2] sm:$0x1]
        %491 = vset.pattern.permute.xlu0 0
        %492 = vperm.xlu0 %491, %v489
        %v493 = vpop.permute.xlu0 %492
        %v495 = vlaneseq
        %v496 = vshrl.u32 %v495, 7
        %v497 = vsub.s32 0, %v496
        %v498 = vrot.slane %v493, %v497
        %vm499 = vcmask 15360
        %v501 = vsel %vm499, %v488, 0
        %v504 = vsel %vm371, %v486, 0
        %v507 = vsel %vm371, %v487, 0
        %509 = vmatprep.subr.mxu0 %v507
        %510 = vmatpush1.msra.mxu0 %v504
        %511 = vmatprep.subr.mxu0 0.0
        %512 = vmatpush1.msra.mxu0 0.0
        %513 = vmatprep.subr.mxu0 0.0
        %514 = vmatpush1.msra.mxu0 0.0
        %515 = vmatprep.subr.mxu0 0.0
        %516 = vmatpush1.msra.mxu0 0.0
        %517 = vmatprep.subr.mxu0 0.0
        %518 = vmatpush1.msra.mxu0 0.0
        %519 = vmatprep.subr.mxu0 0.0
        %520 = vmatpush1.msra.mxu0 0.0
        %521 = vmatprep.subr.mxu0 0.0
        %522 = vmatpush1.msra.mxu0 0.0
        %523 = vmatprep.subr.mxu0 0.0
        %524 = vmatpush1.msra.mxu0 0.0
        %525 = vmatprep.subr.mxu0 0.0
        %526 = vmatpush1.msra.mxu0 0.0
        %527 = vmatprep.subr.mxu0 0.0
        %528 = vmatpush1.msra.mxu0 0.0
        %529 = vmatprep.subr.mxu0 0.0
        %530 = vmatpush1.msra.mxu0 0.0
        %531 = vmatprep.subr.mxu0 0.0
        %532 = vmatpush1.msra.mxu0 0.0
        %533 = vmatprep.subr.mxu0 0.0
        %534 = vmatpush1.msra.mxu0 0.0
        %535 = vmatprep.subr.mxu0 0.0
        %536 = vmatpush1.msra.mxu0 0.0
        %537 = vmatprep.subr.mxu0 0.0
        %538 = vmatpush1.msra.mxu0 0.0
        %539 = vmatprep.subr.mxu0 0.0
        %540 = vmatpush1.msra.mxu0 0.0
        %541 = vmatprep.subr.mxu0 0.0
        %542 = vmatpush1.msra.mxu0 0.0
        %543 = vmatprep.subr.mxu0 0.0
        %544 = vmatpush1.msra.mxu0 0.0
        %545 = vmatprep.subr.mxu0 0.0
        %546 = vmatpush1.msra.mxu0 0.0
        %547 = vmatprep.subr.mxu0 0.0
        %548 = vmatpush1.msra.mxu0 0.0
        %549 = vmatprep.subr.mxu0 0.0
        %550 = vmatpush1.msra.mxu0 0.0
        %551 = vmatprep.subr.mxu0 0.0
        %552 = vmatpush1.msra.mxu0 0.0
        %553 = vmatprep.subr.mxu0 0.0
        %554 = vmatpush1.msra.mxu0 0.0
        %555 = vmatprep.subr.mxu0 0.0
        %556 = vmatpush1.msra.mxu0 0.0
        %557 = vmatprep.subr.mxu0 0.0
        %558 = vmatpush1.msra.mxu0 0.0
        %559 = vmatprep.subr.mxu0 0.0
        %560 = vmatpush1.msra.mxu0 0.0
        %561 = vmatprep.subr.mxu0 0.0
        %562 = vmatpush1.msra.mxu0 0.0
        %563 = vmatprep.subr.mxu0 0.0
        %564 = vmatpush1.msra.mxu0 0.0
        %565 = vmatprep.subr.mxu0 0.0
        %566 = vmatpush1.msra.mxu0 0.0
        %567 = vmatprep.subr.mxu0 0.0
        %568 = vmatpush1.msra.mxu0 0.0
        %569 = vmatprep.subr.mxu0 0.0
        %570 = vmatpush1.msra.mxu0 0.0
        %571 = vmatprep.subr.mxu0 0.0
        %572 = vmatpush1.msra.mxu0 0.0
        %573 = vmatprep.mubr.f32.mxu0 0.0
        %574 = vmatmul.mubr.f32.gmra.mrb[0].mxu0 %v501
        %v575 = vpop.f32.mrb[0].mxu0
        %v576 = vadd.f32 %v498, %v575
        %v577 = vpop.f32.mrb[0].mxu0
        %v578 = vadd.f32 %v498, %v577
        %579 = vdwg.mxu0
        %v580 = vsub.f32 0.0, %v576
        %v581 = vsub.f32 0.0, %v578
        %v582 = vmul.f32 %v580, 1.442695
        %v583 = vpow.pop %v582
        %v584 = vmul.f32 %v581, 1.442695
        %v585 = vpow.pop %v584
        %v586 = vadd.f32 %v583, 1.0
        %v587 = vadd.f32 %v585, 1.0
        %v588 = vrcp.pop %v586
        %v589 = vrcp.pop %v587
        %v590 = vunpack.c.l.bf16 %v355
        %v591 = vlaneseq
        %v592 = vshrl.u32 %v591, 7
        %v593 = vsub.s32 0, %v592
        %v594 = vrot.slane %v588, %v593
        %v595 = vlaneseq
        %v596 = vshrl.u32 %v595, 7
        %v597 = vsub.s32 0, %v596
        %v598 = vrot.slane %v589, %v597
        %v601 = vcombine.low %v594, %v598
        %v603 = vmul.f32 %v590, %v601
        %v605 = vcombine.high %v603, %v603
        %v607 = vpack.c.bf16 %v603, %v603
        %v608 = vpack.c.bf16 %v605, %v605
        %v611 = vcombine.low %v607, %v608
        %v613 = vunpack.c.l.s4 1983009808
        %v614 = vunpack.c.0.s8 %v613
        %v615 = vlaneseq
        %v616 = vshrl.u32 %v615, 7
        %v617 = vsub.s32 %v614, %v616
        %v618 = vrot.slane %v611, %v617
        %620 = vst [vmem:[%s340] sm:$0xf] %v618
        %s621 = sand.u32 %s209, 1
        %s622 = scalar_lea.sflag [#allocation5], %s621
        %s623 = sand.u32 %s209, 1
        %s624 = smul.addr %s623, 4
        %s625 = scalar_lea.vmem [#allocation6], %s624
        // Predicated region
        $region53: #{tpu_custom_call.1} parent=47 // pred_check
          %p626 = pneg %p219
        $region54: #{tpu_custom_call.1} parent=47 // pred_check_branch
          %628 = sbr.rel (%p626) target = $region56
        $region55: #{tpu_custom_call.1} parent=47 // pred_region
          %s629 = smul.u32 2, %s31
          %s631 = ssub.s32 64, 64
          %632 = vsyncadd %s622, %s631
          %s633 = smul.addr %s30, 2
          %s634 = sadd.s32 %s629, %s633
          %s635 = smul.addr %s634, 32
          %s636 = scalar_lea.hbm %s7, %s635
          %s638 = sshll.u32 %s625, 4
          %s639 = int_to_ptr.vmem [resolvable:$true] %s638
          %641 = dma.vmem_to_hbm [thread:$0]  %s639, 64, %s636, %s622
        $region56: #{tpu_custom_call.1} parent=47 // pred_fallthru
          _
      $region48: #{tpu_custom_call.1} parent=5 // pred_fallthru
        _
      %p642 = scmp.le.s32.totalorder 2, %s21
      // Predicated region
      $region57: #{tpu_custom_call.1} parent=5 // pred_check
        %p643 = pneg %p642
      $region58: #{tpu_custom_call.1} parent=5 // pred_check_branch
        %645 = sbr.rel (%p643) target = $region60
      $region59: #{tpu_custom_call.1} parent=5 // pred_region
        %s646 = ssub.s32 %s21, 2
        // Predicated region
        $region61: #{tpu_custom_call.1} parent=59 // pred_check
          %p647 = pneg %p225
        $region62: #{tpu_custom_call.1} parent=59 // pred_check_branch
          %649 = sbr.rel (%p647) target = $region64
        $region63: #{tpu_custom_call.1} parent=59 // pred_region
          %s650 = sand.u32 %s210, 1
          %s651 = scalar_lea.sflag [#allocation5], %s650
          %s652 = sand.u32 %s210, 1
          %s653 = smul.addr %s652, 4
          %s654 = scalar_lea.vmem [#allocation6], %s653
          %655 = dma.done %s651, 64
        $region64: #{tpu_custom_call.1} parent=59 // pred_fallthru
          _
      $region60: #{tpu_custom_call.1} parent=5 // pred_fallthru
        _
    $region6: #{tpu_custom_call.1} parent=1 // loop_footer
      %s25 = sadd.s32 1, %s21
    $region7: #{tpu_custom_call.1} parent=1 // loop_footer_branch
      %20 = sbr.rel target = $region3
    $region8: #{tpu_custom_call.1} parent=1 // loop_exit
      _
    %656 = vsyncpa [#allocation4], 1
    %s657 = scalar_lea.sflag [#allocation4], 1
    %658 = vsyncpa %s657, 1
    %659 = vsyncpa [#allocation5], 1
    %s660 = scalar_lea.sflag [#allocation5], 1
    %661 = vsyncpa %s660, 1

</llo_original>
